<compile_context>
chip_gen: v6e
topology: v6e:2x2x1
jax: 0.10.0
libtpu: 0.0.40
codegen_flags: <defaults>
</compile_context>

<pallas_src>
import functools
import math

import jax
import jax.numpy as jnp
from jax.experimental import pallas as pl
from jax.experimental.pallas import tpu as pltpu


def _round_up(n, m):
    return ((n + m - 1) // m) * m


def _vmem_capacity_bytes():
    """Device VMEM capacity; conservative default if the query is unavailable."""
    try:
        cap = int(pltpu.get_tpu_info().vmem_capacity_bytes)
        if cap > 0:
            return cap
    except Exception:
        pass
    return 64 << 20  # v7x per-TensorCore VMEM (smallest of the targets)


# --------------------------------------------------------------------------
# Fused (weights-resident) path
# --------------------------------------------------------------------------
def _mlp_fused_kernel(x_ref, *refs, num_layers):
    """Fused MLP: refs = (w0, b0, w1, b1, ..., w_{L-1}, b_{L-1}, o_ref)."""
    o_ref = refs[-1]
    params = refs[:-1]
    h = x_ref[...]                                     # (row_tile, in_dim)
    for i in range(num_layers):
        w = params[2 * i][...]                         # (in_i, out_i[_padded])
        b = params[2 * i + 1][...]                     # (1, out_i[_padded]) f32
        # Feed the MXU in the weight dtype (bf16 weights -> native bf16 path),
        # accumulate in f32; bias add + ReLU epilogue stays f32 in vregs.
        h = jnp.dot(h.astype(w.dtype), w, preferred_element_type=jnp.float32)
        h = h + b
        if i < num_layers - 1:                         # ReLU on all but last
            h = jnp.maximum(h, 0.0)
    o_ref[...] = h.astype(o_ref.dtype)                 # cast fused into store


def _prepare_params(weights, biases, *, lane=128, compute_dtype=None):
    """Zero-pad hidden output dims to `lane`; never pad the final out_dim.

    The next layer's weight gets matching zero rows so padded hidden units
    contribute exactly zero -> numerics unchanged.  Biases are pre-cast to
    f32 and reshaped (1, out) so the in-kernel add is a sublane broadcast.
    """
    num_layers = len(weights)
    padded_w, padded_b = [], []
    prev_extra = 0
    for i, (w, b) in enumerate(zip(weights, biases)):
        fin, fout = w.shape
        last = (i == num_layers - 1)
        fout_p = fout if last else _round_up(fout, lane)
        w_p = jnp.pad(w, ((0, prev_extra), (0, fout_p - fout)))
        if compute_dtype is not None:
            w_p = w_p.astype(compute_dtype)
        b_p = jnp.pad(b, (0, fout_p - fout)).astype(jnp.float32).reshape(1, fout_p)
        padded_w.append(w_p)
        padded_b.append(b_p)
        prev_extra = fout_p - fout
    return padded_w, padded_b


def _mlp_fused(x2d, w_pad, b_pad, out_dtype, row_tile, vmem_limit,
               single_buffer_params):
    m, in_dim = x2d.shape
    out_dim = w_pad[-1].shape[-1]
    num_layers = len(w_pad)
    kernel = functools.partial(_mlp_fused_kernel, num_layers=num_layers)

    in_specs = [pl.BlockSpec((row_tile, in_dim), lambda i: (i, 0))]
    operands = [x2d]
    for w, b in zip(w_pad, b_pad):
        if single_buffer_params:
            # Constant index_map -> no need for a second VMEM copy.
            in_specs.append(pl.BlockSpec(w.shape, lambda i: (0, 0),
                                         pipeline_mode=pl.Buffered(1)))
            in_specs.append(pl.BlockSpec(b.shape, lambda i: (0, 0),
                                         pipeline_mode=pl.Buffered(1)))
        else:
            in_specs.append(pl.BlockSpec(w.shape, lambda i: (0, 0)))
            in_specs.append(pl.BlockSpec(b.shape, lambda i: (0, 0)))
        operands.append(w)
        operands.append(b)

    return pl.pallas_call(
        kernel,
        out_shape=jax.ShapeDtypeStruct((m, out_dim), out_dtype),
        grid=(pl.cdiv(m, row_tile),),
        in_specs=in_specs,
        out_specs=pl.BlockSpec((row_tile, out_dim), lambda i: (i, 0)),
        compiler_params=pltpu.CompilerParams(
            dimension_semantics=("parallel",),
            vmem_limit_bytes=vmem_limit),
    )(*operands)


# --------------------------------------------------------------------------
# Tiled per-layer fallback (for layers whose weights do not fit VMEM)
# --------------------------------------------------------------------------
def _linear_tiled_kernel(x_ref, w_ref, b_ref, o_ref, acc_ref, *, relu):
    @pl.when(pl.program_id(2) == 0)
    def _():
        acc_ref[...] = jnp.zeros_like(acc_ref)

    acc_ref[...] += jnp.dot(x_ref[...].astype(w_ref.dtype), w_ref[...],
                            preferred_element_type=jnp.float32)

    @pl.when(pl.program_id(2) == pl.num_programs(2) - 1)
    def _():
        h = acc_ref[...] + b_ref[...]
        if relu:
            h = jnp.maximum(h, 0.0)
        o_ref[...] = h.astype(o_ref.dtype)


def _pick_k_tile(k):
    # K tiles must divide K exactly (ragged reduction blocks would sum garbage).
    for c in (2048, 1024, 512, 256, 128):
        if k % c == 0:
            return c
    return k


def _linear_tiled(x2d, w, b_f32, relu, out_dtype, vmem_limit):
    m, k = x2d.shape
    n = w.shape[-1]
    m8 = _round_up(max(m, 1), 8)
    tm = max(8, min(1024, m8))
    tn = n if n <= 1024 else 512        # <n blocks must be 128-multiples: 512 ok
    tk = _pick_k_tile(k)
    kernel = functools.partial(_linear_tiled_kernel, relu=relu)
    return pl.pallas_call(
        kernel,
        out_shape=jax.ShapeDtypeStruct((m, n), out_dtype),
        grid=(pl.cdiv(m, tm), pl.cdiv(n, tn), k // tk),
        in_specs=[pl.BlockSpec((tm, tk), lambda i, j, kk: (i, kk)),
                  pl.BlockSpec((tk, tn), lambda i, j, kk: (kk, j)),
                  pl.BlockSpec((1, tn), lambda i, j, kk: (0, j))],
        out_specs=pl.BlockSpec((tm, tn), lambda i, j, kk: (i, j)),
        scratch_shapes=[pltpu.VMEM((tm, tn), jnp.float32)],
        compiler_params=pltpu.CompilerParams(
            dimension_semantics=("parallel", "parallel", "arbitrary"),
            vmem_limit_bytes=vmem_limit),
    )(x2d, w, b_f32)


def _mlp_tiled(x2d, weights, biases_f32, out_dtype, vmem_limit):
    h = x2d
    n_layers = len(weights)
    for i, (w, b) in enumerate(zip(weights, biases_f32)):
        relu = i < n_layers - 1
        layer_dtype = jnp.float32 if relu else out_dtype   # f32 intermediates
        h = _linear_tiled(h, w, b, relu, layer_dtype, vmem_limit)
    return h


# --------------------------------------------------------------------------
# Public wrapper
# --------------------------------------------------------------------------
def mlp_pallas(x, weights, biases, *, row_tile=4096, lane=128,
               compute_dtype=None, force_tiled=False):
    """Apply the MLP to x of shape (..., in_dim).

    weights[i]: (in_i, out_i)   (transposed vs. PyTorch nn.Linear.weight)
    biases[i] : (out_i,)
    compute_dtype: optional (e.g. jnp.bfloat16) -> pre-cast weights once and
      run the matmuls on the native low-precision MXU path (f32 accumulation).
      Changes numerics slightly; default None keeps the weights' dtype.
    """
    in_dim = x.shape[-1]
    out_dim = weights[-1].shape[-1]
    lead_shape = x.shape[:-1]

    x2d = x.reshape(-1, in_dim)                        # == x.view(-1, x.shape[-1])
    m = x2d.shape[0]
    itemsize = jnp.dtype(x.dtype).itemsize

    budget = int(0.75 * _vmem_capacity_bytes())

    w_pad, b_pad = _prepare_params(weights, biases, lane=lane,
                                   compute_dtype=compute_dtype)
    param_bytes = sum(int(a.size) * jnp.dtype(a.dtype).itemsize
                      for a in (*w_pad, *b_pad))
    max_feat = max(max(wp.shape[-1] for wp in w_pad), in_dim)

    # ---- row-tile selection (multiple of 8; no host-side row padding) ----
    m8 = _round_up(max(m, 1), 8)
    row_tile = max(8, min(_round_up(row_tile, 8), m8))
    if m8 >= 1024:
        # v7x has 2 TensorCores: make sure the "parallel" grid has >=2 steps.
        row_tile = min(row_tile, _round_up(pl.cdiv(m8, 2), 8))

    def fused_vmem(rt):
        return (2 * rt * in_dim * itemsize             # double-buffered x tiles
                + 2 * rt * out_dim * itemsize          # double-buffered out tiles
                + 2 * param_bytes                      # resident params (worst case)
                + 2 * rt * max_feat * 4)               # ~2 live f32 intermediates

    while row_tile > 256 and fused_vmem(row_tile) > budget:
        row_tile = max(256, _round_up(row_tile // 2, 8))

    use_fused = (not force_tiled) and fused_vmem(row_tile) <= budget

    if use_fused:
        vmem_limit = int(min(max(int(1.25 * fused_vmem(row_tile)), 16 << 20),
                             budget))
        try:
            out2d = _mlp_fused(x2d, w_pad, b_pad, x.dtype, row_tile, vmem_limit,
                               single_buffer_params=True)
        except Exception:
            # Fallback if single-buffered resident specs fail to lower.
            out2d = _mlp_fused(x2d, w_pad, b_pad, x.dtype, row_tile, vmem_limit,
                               single_buffer_params=False)
    else:
        # Weights too large to keep resident: per-layer tiled matmuls.
        w_raw, b_raw = _prepare_params(weights, biases, lane=1,
                                       compute_dtype=compute_dtype)
        out2d = _mlp_tiled(x2d, w_raw, b_raw, x.dtype, int(budget))

    # No row/feature padding to strip: out2d is exactly (m, out_dim).
    return out2d.reshape(*lead_shape, out_dim)


# --------------------------------------------------------------------------
# Reference / init / test
# --------------------------------------------------------------------------
def init_mlp_params(key, in_dim, hidden_list, out_dim, dtype=jnp.float32):
    """Deterministic init matching nn.Linear's default (Kaiming-uniform-ish)."""
    dims = [in_dim] + list(hidden_list) + [out_dim]
    weights, biases = [], []
    for i in range(len(dims) - 1):
        fan_in, fan_out = dims[i], dims[i + 1]
        key, kw, kb = jax.random.split(key, 3)
        bound_w = math.sqrt(1.0 / fan_in) * math.sqrt(3.0)  # kaiming_uniform(a=sqrt(5))
        bound_b = 1.0 / math.sqrt(fan_in)
        w = jax.random.uniform(kw, (fan_in, fan_out), dtype, -bound_w, bound_w)
        b = jax.random.uniform(kb, (fan_out,), dtype, -bound_b, bound_b)
        weights.append(w)
        biases.append(b)
    return weights, biases


def mlp_reference(x, weights, biases):
    """Pure-JAX reference with identical semantics."""
    lead_shape = x.shape[:-1]
    h = x.reshape(-1, x.shape[-1]).astype(jnp.float32)
    n = len(weights)
    for i, (w, b) in enumerate(zip(weights, biases)):
        h = h @ w.astype(jnp.float32) + b.astype(jnp.float32)
        if i < n - 1:
            h = jnp.maximum(h, 0.0)
    return h.astype(x.dtype).reshape(*lead_shape, -1)


if __name__ == "__main__":
    # cfg: in_dim=16, hidden_list=[32, 32], out_dim=8
    in_dim, hidden_list, out_dim = 16, [32, 32], 8

    key = jax.random.PRNGKey(0)
    key, kx1, kx2 = jax.random.split(key, 3)
    weights, biases = init_mlp_params(key, in_dim, hidden_list, out_dim)

    # Small shape consistent with the module's forward: x of shape (2, 8, 16).
    x_small = jax.random.normal(kx1, (2, 8, in_dim), jnp.float32)
    out_small = jax.block_until_ready(mlp_pallas(x_small, weights, biases))
    ref_small = mlp_reference(x_small, weights, biases)
    assert out_small.shape == (2, 8, out_dim), out_small.shape
    assert jnp.allclose(out_small, ref_small, atol=1e-4, rtol=1e-4), \
        "mismatch vs reference (small)"

    # Non-tile-divisible row count: ragged last block + >=2 parallel grid steps.
    x_big = jax.random.normal(kx2, (4, 300, in_dim), jnp.float32)
    out_big = jax.block_until_ready(mlp_pallas(x_big, weights, biases))
    ref_big = mlp_reference(x_big, weights, biases)
    assert out_big.shape == (4, 300, out_dim), out_big.shape
    assert jnp.allclose(out_big, ref_big, atol=1e-4, rtol=1e-4), \
        "mismatch vs reference (big)"

    # Exercise the tiled fallback path (used when weights don't fit VMEM).
    out_tiled = jax.block_until_ready(
        mlp_pallas(x_big, weights, biases, force_tiled=True))
    assert jnp.allclose(out_tiled, ref_big, atol=1e-4, rtol=1e-4), \
        "mismatch vs reference (tiled fallback)"

    print("KERNEL_OK")
</pallas_src>

<mosaic_0001>
module attributes {stable_mosaic.version = 11 : i64} {
  func.func @_mlp_fused_kernel(%arg0: i32, %arg1: memref<16x16xf32, #tpu.memory_space<vmem>>, %arg2: memref<16x128xf32, #tpu.memory_space<vmem>>, %arg3: memref<1x128xf32, #tpu.memory_space<vmem>>, %arg4: memref<128x128xf32, #tpu.memory_space<vmem>>, %arg5: memref<1x128xf32, #tpu.memory_space<vmem>>, %arg6: memref<128x8xf32, #tpu.memory_space<vmem>>, %arg7: memref<1x8xf32, #tpu.memory_space<vmem>>, %arg8: memref<16x8xf32, #tpu.memory_space<vmem>>) attributes {dimension_semantics = [#tpu.dimension_semantics<parallel>], iteration_bounds = array<i64: 1>, scalar_prefetch = 0 : i64, scratch_operands = 0 : i64, tpu.core_type = #tpu.core_type<tc>, window_params = [{transform_indices = @transform_0, window_bounds = array<i64: 16, 16>}, {pipeline_mode = #tpu.pipeline_mode<synchronous>, transform_indices = @transform_1, window_bounds = array<i64: 16, 128>}, {pipeline_mode = #tpu.pipeline_mode<synchronous>, transform_indices = @transform_2, window_bounds = array<i64: 1, 128>}, {pipeline_mode = #tpu.pipeline_mode<synchronous>, transform_indices = @transform_3, window_bounds = array<i64: 128, 128>}, {pipeline_mode = #tpu.pipeline_mode<synchronous>, transform_indices = @transform_4, window_bounds = array<i64: 1, 128>}, {pipeline_mode = #tpu.pipeline_mode<synchronous>, transform_indices = @transform_5, window_bounds = array<i64: 128, 8>}, {pipeline_mode = #tpu.pipeline_mode<synchronous>, transform_indices = @transform_6, window_bounds = array<i64: 1, 8>}, {transform_indices = @transform_7, window_bounds = array<i64: 16, 8>}]} {
    %c0 = arith.constant 0 : index
    %c0_0 = arith.constant 0 : index
    %0 = vector.load %arg1[%c0, %c0_0] : memref<16x16xf32, #tpu.memory_space<vmem>>, vector<16x16xf32>
    %c0_1 = arith.constant 0 : index
    %c0_2 = arith.constant 0 : index
    %1 = vector.load %arg2[%c0_1, %c0_2] : memref<16x128xf32, #tpu.memory_space<vmem>>, vector<16x128xf32>
    %c0_3 = arith.constant 0 : index
    %c0_4 = arith.constant 0 : index
    %2 = vector.load %arg3[%c0_3, %c0_4] : memref<1x128xf32, #tpu.memory_space<vmem>>, vector<1x128xf32>
    %cst = arith.constant dense<0.000000e+00> : vector<16x128xf32>
    %3 = tpu.matmul %0, %1, %cst {dimension_numbers = #tpu.dot_dimension_numbers<[1], [0], [0], [1], [0, 0, 1, 1], [], []>} : vector<16x16xf32>, vector<16x128xf32>, vector<16x128xf32> -> vector<16x128xf32>
    %4 = vector.broadcast %2 : vector<1x128xf32> to vector<16x128xf32>
    %5 = arith.addf %3, %4 : vector<16x128xf32>
    %cst_5 = arith.constant 0.000000e+00 : f32
    %6 = vector.broadcast %cst_5 : f32 to vector<16x128xf32>
    %7 = arith.maximumf %5, %6 : vector<16x128xf32>
    %c0_6 = arith.constant 0 : index
    %c0_7 = arith.constant 0 : index
    %8 = vector.load %arg4[%c0_6, %c0_7] : memref<128x128xf32, #tpu.memory_space<vmem>>, vector<128x128xf32>
    %c0_8 = arith.constant 0 : index
    %c0_9 = arith.constant 0 : index
    %9 = vector.load %arg5[%c0_8, %c0_9] : memref<1x128xf32, #tpu.memory_space<vmem>>, vector<1x128xf32>
    %cst_10 = arith.constant dense<0.000000e+00> : vector<16x128xf32>
    %10 = tpu.matmul %7, %8, %cst_10 {dimension_numbers = #tpu.dot_dimension_numbers<[1], [0], [0], [1], [0, 0, 1, 1], [], []>} : vector<16x128xf32>, vector<128x128xf32>, vector<16x128xf32> -> vector<16x128xf32>
    %11 = vector.broadcast %9 : vector<1x128xf32> to vector<16x128xf32>
    %12 = arith.addf %10, %11 : vector<16x128xf32>
    %cst_11 = arith.constant 0.000000e+00 : f32
    %13 = vector.broadcast %cst_11 : f32 to vector<16x128xf32>
    %14 = arith.maximumf %12, %13 : vector<16x128xf32>
    %c0_12 = arith.constant 0 : index
    %c0_13 = arith.constant 0 : index
    %15 = vector.load %arg6[%c0_12, %c0_13] : memref<128x8xf32, #tpu.memory_space<vmem>>, vector<128x8xf32>
    %c0_14 = arith.constant 0 : index
    %c0_15 = arith.constant 0 : index
    %16 = vector.load %arg7[%c0_14, %c0_15] : memref<1x8xf32, #tpu.memory_space<vmem>>, vector<1x8xf32>
    %cst_16 = arith.constant dense<0.000000e+00> : vector<16x8xf32>
    %17 = tpu.matmul %14, %15, %cst_16 {dimension_numbers = #tpu.dot_dimension_numbers<[1], [0], [0], [1], [0, 0, 1, 1], [], []>} : vector<16x128xf32>, vector<128x8xf32>, vector<16x8xf32> -> vector<16x8xf32>
    %18 = vector.broadcast %16 : vector<1x8xf32> to vector<16x8xf32>
    %19 = arith.addf %17, %18 : vector<16x8xf32>
    %c0_17 = arith.constant 0 : index
    %c0_18 = arith.constant 0 : index
    %20 = vector.load %arg8[%c0_17, %c0_18] : memref<16x8xf32, #tpu.memory_space<vmem>>, vector<16x8xf32>
    tpu.vector_store %arg8[%c0_17, %c0_18], %19 {strides = array<i32>} : memref<16x8xf32, #tpu.memory_space<vmem>>, vector<16x8xf32>,
    return
  }
  func.func @transform_0(%arg0: i32) -> (i32, i32) {
    %c0_i32 = arith.constant 0 : i32
    %c0_i32_0 = arith.constant 0 : i32
    return %arg0, %c0_i32 : i32, i32
  }
  func.func @transform_1(%arg0: i32) -> (i32, i32) {
    %c0_i32 = arith.constant 0 : i32
    %c0_i32_0 = arith.constant 0 : i32
    %c0_i32_1 = arith.constant 0 : i32
    return %c0_i32, %c0_i32_0 : i32, i32
  }
  func.func @transform_2(%arg0: i32) -> (i32, i32) {
    %c0_i32 = arith.constant 0 : i32
    %c0_i32_0 = arith.constant 0 : i32
    %c0_i32_1 = arith.constant 0 : i32
    return %c0_i32, %c0_i32_0 : i32, i32
  }
  func.func @transform_3(%arg0: i32) -> (i32, i32) {
    %c0_i32 = arith.constant 0 : i32
    %c0_i32_0 = arith.constant 0 : i32
    %c0_i32_1 = arith.constant 0 : i32
    return %c0_i32, %c0_i32_0 : i32, i32
  }
  func.func @transform_4(%arg0: i32) -> (i32, i32) {
    %c0_i32 = arith.constant 0 : i32
    %c0_i32_0 = arith.constant 0 : i32
    %c0_i32_1 = arith.constant 0 : i32
    return %c0_i32, %c0_i32_0 : i32, i32
  }
  func.func @transform_5(%arg0: i32) -> (i32, i32) {
    %c0_i32 = arith.constant 0 : i32
    %c0_i32_0 = arith.constant 0 : i32
    %c0_i32_1 = arith.constant 0 : i32
    return %c0_i32, %c0_i32_0 : i32, i32
  }
  func.func @transform_6(%arg0: i32) -> (i32, i32) {
    %c0_i32 = arith.constant 0 : i32
    %c0_i32_0 = arith.constant 0 : i32
    %c0_i32_1 = arith.constant 0 : i32
    return %c0_i32, %c0_i32_0 : i32, i32
  }
  func.func @transform_7(%arg0: i32) -> (i32, i32) {
    %c0_i32 = arith.constant 0 : i32
    %c0_i32_0 = arith.constant 0 : i32
    return %arg0, %c0_i32 : i32, i32
  }
}

module attributes {stable_mosaic.version = 11 : i64} {
  func.func @_mlp_fused_kernel(%arg0: i32, %arg1: memref<16x16xf32, #tpu.memory_space<vmem>>, %arg2: memref<16x128xf32, #tpu.memory_space<vmem>>, %arg3: memref<1x128xf32, #tpu.memory_space<vmem>>, %arg4: memref<128x128xf32, #tpu.memory_space<vmem>>, %arg5: memref<1x128xf32, #tpu.memory_space<vmem>>, %arg6: memref<128x8xf32, #tpu.memory_space<vmem>>, %arg7: memref<1x8xf32, #tpu.memory_space<vmem>>, %arg8: memref<16x8xf32, #tpu.memory_space<vmem>>) attributes {dimension_semantics = [#tpu.dimension_semantics<parallel>], iteration_bounds = array<i64: 1>, scalar_prefetch = 0 : i64, scratch_operands = 0 : i64, tpu.core_type = #tpu.core_type<tc>, window_params = [{transform_indices = @transform_0, window_bounds = array<i64: 16, 16>}, {pipeline_mode = #tpu.pipeline_mode<synchronous>, transform_indices = @transform_1, window_bounds = array<i64: 16, 128>}, {pipeline_mode = #tpu.pipeline_mode<synchronous>, transform_indices = @transform_2, window_bounds = array<i64: 1, 128>}, {pipeline_mode = #tpu.pipeline_mode<synchronous>, transform_indices = @transform_3, window_bounds = array<i64: 128, 128>}, {pipeline_mode = #tpu.pipeline_mode<synchronous>, transform_indices = @transform_4, window_bounds = array<i64: 1, 128>}, {pipeline_mode = #tpu.pipeline_mode<synchronous>, transform_indices = @transform_5, window_bounds = array<i64: 128, 8>}, {pipeline_mode = #tpu.pipeline_mode<synchronous>, transform_indices = @transform_6, window_bounds = array<i64: 1, 8>}, {transform_indices = @transform_7, window_bounds = array<i64: 16, 8>}]} {
    %c0 = arith.constant 0 : index
    %c0_0 = arith.constant 0 : index
    %0 = vector.load %arg1[%c0, %c0_0] : memref<16x16xf32, #tpu.memory_space<vmem>>, vector<16x16xf32>
    %c0_1 = arith.constant 0 : index
    %c0_2 = arith.constant 0 : index
    %1 = vector.load %arg2[%c0_1, %c0_2] : memref<16x128xf32, #tpu.memory_space<vmem>>, vector<16x128xf32>
    %c0_3 = arith.constant 0 : index
    %c0_4 = arith.constant 0 : index
    %2 = vector.load %arg3[%c0_3, %c0_4] : memref<1x128xf32, #tpu.memory_space<vmem>>, vector<1x128xf32>
    %cst = arith.constant dense<0.000000e+00> : vector<16x128xf32>
    %3 = tpu.matmul %0, %1, %cst {dimension_numbers = #tpu.dot_dimension_numbers<[1], [0], [0], [1], [0, 0, 1, 1], [], []>} : vector<16x16xf32>, vector<16x128xf32>, vector<16x128xf32> -> vector<16x128xf32>
    %4 = vector.broadcast %2 : vector<1x128xf32> to vector<16x128xf32>
    %5 = arith.addf %3, %4 : vector<16x128xf32>
    %cst_5 = arith.constant 0.000000e+00 : f32
    %6 = vector.broadcast %cst_5 : f32 to vector<16x128xf32>
    %7 = arith.maximumf %5, %6 : vector<16x128xf32>
    %c0_6 = arith.constant 0 : index
    %c0_7 = arith.constant 0 : index
    %8 = vector.load %arg4[%c0_6, %c0_7] : memref<128x128xf32, #tpu.memory_space<vmem>>, vector<128x128xf32>
    %c0_8 = arith.constant 0 : index
    %c0_9 = arith.constant 0 : index
    %9 = vector.load %arg5[%c0_8, %c0_9] : memref<1x128xf32, #tpu.memory_space<vmem>>, vector<1x128xf32>
    %cst_10 = arith.constant dense<0.000000e+00> : vector<16x128xf32>
    %10 = tpu.matmul %7, %8, %cst_10 {dimension_numbers = #tpu.dot_dimension_numbers<[1], [0], [0], [1], [0, 0, 1, 1], [], []>} : vector<16x128xf32>, vector<128x128xf32>, vector<16x128xf32> -> vector<16x128xf32>
    %11 = vector.broadcast %9 : vector<1x128xf32> to vector<16x128xf32>
    %12 = arith.addf %10, %11 : vector<16x128xf32>
    %cst_11 = arith.constant 0.000000e+00 : f32
    %13 = vector.broadcast %cst_11 : f32 to vector<16x128xf32>
    %14 = arith.maximumf %12, %13 : vector<16x128xf32>
    %c0_12 = arith.constant 0 : index
    %c0_13 = arith.constant 0 : index
    %15 = vector.load %arg6[%c0_12, %c0_13] : memref<128x8xf32, #tpu.memory_space<vmem>>, vector<128x8xf32>
    %c0_14 = arith.constant 0 : index
    %c0_15 = arith.constant 0 : index
    %16 = vector.load %arg7[%c0_14, %c0_15] : memref<1x8xf32, #tpu.memory_space<vmem>>, vector<1x8xf32>
    %cst_16 = arith.constant dense<0.000000e+00> : vector<16x8xf32>
    %17 = tpu.matmul %14, %15, %cst_16 {dimension_numbers = #tpu.dot_dimension_numbers<[1], [0], [0], [1], [0, 0, 1, 1], [], []>} : vector<16x128xf32>, vector<128x8xf32>, vector<16x8xf32> -> vector<16x8xf32>
    %18 = vector.broadcast %16 : vector<1x8xf32> to vector<16x8xf32>
    %19 = arith.addf %17, %18 : vector<16x8xf32>
    %c0_17 = arith.constant 0 : index
    %c0_18 = arith.constant 0 : index
    %20 = vector.load %arg8[%c0_17, %c0_18] : memref<16x8xf32, #tpu.memory_space<vmem>>, vector<16x8xf32>
    tpu.vector_store %arg8[%c0_17, %c0_18], %19 {strides = array<i32>} : memref<16x8xf32, #tpu.memory_space<vmem>>, vector<16x8xf32>,
    return
  }
  func.func @transform_0(%arg0: i32) -> (i32, i32) {
    %c0_i32 = arith.constant 0 : i32
    %c0_i32_0 = arith.constant 0 : i32
    return %arg0, %c0_i32 : i32, i32
  }
  func.func @transform_1(%arg0: i32) -> (i32, i32) {
    %c0_i32 = arith.constant 0 : i32
    %c0_i32_0 = arith.constant 0 : i32
    %c0_i32_1 = arith.constant 0 : i32
    return %c0_i32, %c0_i32_0 : i32, i32
  }
  func.func @transform_2(%arg0: i32) -> (i32, i32) {
    %c0_i32 = arith.constant 0 : i32
    %c0_i32_0 = arith.constant 0 : i32
    %c0_i32_1 = arith.constant 0 : i32
    return %c0_i32, %c0_i32_0 : i32, i32
  }
  func.func @transform_3(%arg0: i32) -> (i32, i32) {
    %c0_i32 = arith.constant 0 : i32
    %c0_i32_0 = arith.constant 0 : i32
    %c0_i32_1 = arith.constant 0 : i32
    return %c0_i32, %c0_i32_0 : i32, i32
  }
  func.func @transform_4(%arg0: i32) -> (i32, i32) {
    %c0_i32 = arith.constant 0 : i32
    %c0_i32_0 = arith.constant 0 : i32
    %c0_i32_1 = arith.constant 0 : i32
    return %c0_i32, %c0_i32_0 : i32, i32
  }
  func.func @transform_5(%arg0: i32) -> (i32, i32) {
    %c0_i32 = arith.constant 0 : i32
    %c0_i32_0 = arith.constant 0 : i32
    %c0_i32_1 = arith.constant 0 : i32
    return %c0_i32, %c0_i32_0 : i32, i32
  }
  func.func @transform_6(%arg0: i32) -> (i32, i32) {
    %c0_i32 = arith.constant 0 : i32
    %c0_i32_0 = arith.constant 0 : i32
    %c0_i32_1 = arith.constant 0 : i32
    return %c0_i32, %c0_i32_0 : i32, i32
  }
  func.func @transform_7(%arg0: i32) -> (i32, i32) {
    %c0_i32 = arith.constant 0 : i32
    %c0_i32_0 = arith.constant 0 : i32
    return %arg0, %c0_i32 : i32, i32
  }
}

</mosaic_0001>

<llo_original>
// kernel: tpu_custom_call.1
$region0: #{tpu_custom_call.1}
  #allocation0 [shape = 'u32[]', space=smem, size = 0x4, offset = 0x4, fixed_abs, tag = 'smem constant byte address 0x4 - core index']
  #allocation1 [shape = 'u32[144,128]{1,0:T(1,128)}', space=vmem, size = 0x12000, scoped, tag = 'internal scratch']
  %s0 = inlined_call_operand.hbm [shape: f32[16,16], index: 0, kind: input, shape index: {}]
  %s1 = inlined_call_operand.hbm [shape: f32[16,128], index: 1, kind: input, shape index: {}]
  %s2 = inlined_call_operand.vmem [shape: f32[1,128], index: 2, kind: input, shape index: {}]
  %s3 = inlined_call_operand.vmem [shape: f32[128,128], index: 3, kind: input, shape index: {}]
  %s4 = inlined_call_operand.vmem [shape: f32[1,128], index: 4, kind: input, shape index: {}]
  %s5 = inlined_call_operand.vmem [shape: f32[128,8], index: 5, kind: input, shape index: {}]
  %s6 = inlined_call_operand.vmem [shape: f32[1,8], index: 6, kind: input, shape index: {}]
  %s7 = inlined_call_operand.vmem [shape: f32[16,8], index: 7, kind: output, shape index: {}]
  %s8 = sld [smem:[#allocation0]]
  $region46: #{tpu_custom_call.1} parent=0
    _
  %s10 = ssub.s32 1, %s8
  %s11 = scalar_select 0, %s10, %s8
  $region1: #{tpu_custom_call.1} parent=0
    #allocation2 [shape = 'u8[8192]{0}', space=vmem, size = 0x2000, scoped, tag = 'input window, operand 0, single buffered']
    #allocation3 [shape = 's32[1]{0}', space=sflag, size = 0x4, scoped, tag = 'scoped memory for tpu_custom_call.1']
    #allocation4 [shape = 'u8[8192]{0}', space=vmem, size = 0x2000, scoped, tag = 'input window, operand 1, single buffered']
    #allocation5 [shape = 's32[1]{0}', space=sflag, size = 0x4, scoped, tag = 'scoped memory for tpu_custom_call.1']
    %12 = vsyncpa [#allocation3], 0
    %13 = vsyncpa [#allocation5], 0
    // Predicated region
    $region2: #{tpu_custom_call.1} parent=1 // pred_check
      _
    $region3: #{tpu_custom_call.1} parent=1 // pred_check_branch
      %15 = sbr.rel (0) target = $region5
    $region4: #{tpu_custom_call.1} parent=1 // pred_region
      %s17 = ssub.s32 256, 256
      %18 = vsyncadd [#allocation3], %s17
      %s19 = sshll.u32 [#allocation2], 4
      %s20 = int_to_ptr.vmem [resolvable:$true] %s19
      %25 = dma.hbm_to_vmem [thread:$0]  %s0, 256, %s20, [#allocation3], 128, 128, 8
    $region5: #{tpu_custom_call.1} parent=1 // pred_fallthru
      _
    // Predicated region
    $region6: #{tpu_custom_call.1} parent=1 // pred_check
      _
    $region7: #{tpu_custom_call.1} parent=1 // pred_check_branch
      %27 = sbr.rel (0) target = $region9
    $region8: #{tpu_custom_call.1} parent=1 // pred_region
      %s29 = ssub.s32 256, 256
      %30 = vsyncadd [#allocation5], %s29
      %s31 = sshll.u32 [#allocation4], 4
      %s32 = int_to_ptr.vmem [resolvable:$true] %s31
      %37 = dma.hbm_to_vmem [thread:$0]  %s1, 256, %s32, [#allocation5], 128, 128, 8
    $region9: #{tpu_custom_call.1} parent=1 // pred_fallthru
      _
    // Predicated region
    $region10: #{tpu_custom_call.1} parent=1 // pred_check
      _
    $region11: #{tpu_custom_call.1} parent=1 // pred_check_branch
      %39 = sbr.rel (0) target = $region13
    $region12: #{tpu_custom_call.1} parent=1 // pred_region
      _
    $region13: #{tpu_custom_call.1} parent=1 // pred_fallthru
      _
    // Predicated region
    $region14: #{tpu_custom_call.1} parent=1 // pred_check
      _
    $region15: #{tpu_custom_call.1} parent=1 // pred_check_branch
      %41 = sbr.rel (0) target = $region17
    $region16: #{tpu_custom_call.1} parent=1 // pred_region
      _
    $region17: #{tpu_custom_call.1} parent=1 // pred_fallthru
      _
    // Predicated region
    $region18: #{tpu_custom_call.1} parent=1 // pred_check
      _
    $region19: #{tpu_custom_call.1} parent=1 // pred_check_branch
      %43 = sbr.rel (0) target = $region21
    $region20: #{tpu_custom_call.1} parent=1 // pred_region
      _
    $region21: #{tpu_custom_call.1} parent=1 // pred_fallthru
      _
    // Predicated region
    $region22: #{tpu_custom_call.1} parent=1 // pred_check
      _
    $region23: #{tpu_custom_call.1} parent=1 // pred_check_branch
      %45 = sbr.rel (0) target = $region25
    $region24: #{tpu_custom_call.1} parent=1 // pred_region
      _
    $region25: #{tpu_custom_call.1} parent=1 // pred_fallthru
      _
    // Predicated region
    $region26: #{tpu_custom_call.1} parent=1 // pred_check
      _
    $region27: #{tpu_custom_call.1} parent=1 // pred_check_branch
      %47 = sbr.rel (0) target = $region29
    $region28: #{tpu_custom_call.1} parent=1 // pred_region
      _
    $region29: #{tpu_custom_call.1} parent=1 // pred_fallthru
      _
    // Predicated region
    $region30: #{tpu_custom_call.1} parent=1 // pred_check
      _
    $region31: #{tpu_custom_call.1} parent=1 // pred_check_branch
      %49 = sbr.rel (0) target = $region33
    $region32: #{tpu_custom_call.1} parent=1 // pred_region
      %50 = dma.done [#allocation3], 256
    $region33: #{tpu_custom_call.1} parent=1 // pred_fallthru
      _
    // Predicated region
    $region34: #{tpu_custom_call.1} parent=1 // pred_check
      _
    $region35: #{tpu_custom_call.1} parent=1 // pred_check_branch
      %52 = sbr.rel (0) target = $region37
    $region36: #{tpu_custom_call.1} parent=1 // pred_region
      %53 = dma.done [#allocation5], 256
    $region37: #{tpu_custom_call.1} parent=1 // pred_fallthru
      _
    %v54 = vld [vmem:[#allocation2] sm:$0xff]
    %v55 = vld [vmem:[#allocation2 + $0x8] sm:$0xff]
    %v56 = vld [vmem:[#allocation4] sm:$0xff]
    %v57 = vld [vmem:[#allocation4 + $0x8] sm:$0xff]
    %v58 = vld [vmem:[%s2] sm:$0x1]
    %v60 = vlaneseq
    %v61 = vshrl.u32 %v60, 7
    %v62 = vsub.s32 0, %v61
    %v63 = vrot.slane %v58, %v62
    %vm65 = vcmask 130048
    %v67 = vsel %vm65, %v54, 0
    %v70 = vsel %vm65, %v55, 0
    %72 = vmatprep.subr.mxu0 0.0
    %73 = vmatpush1.msra.mxu0 0.0
    %74 = vmatprep.subr.mxu0 0.0
    %75 = vmatpush1.msra.mxu0 0.0
    %76 = vmatprep.subr.mxu0 0.0
    %77 = vmatpush1.msra.mxu0 0.0
    %78 = vmatprep.subr.mxu0 0.0
    %79 = vmatpush1.msra.mxu0 0.0
    %80 = vmatprep.subr.mxu0 0.0
    %81 = vmatpush1.msra.mxu0 0.0
    %82 = vmatprep.subr.mxu0 0.0
    %83 = vmatpush1.msra.mxu0 0.0
    %84 = vmatprep.subr.mxu0 0.0
    %85 = vmatpush1.msra.mxu0 0.0
    %86 = vmatprep.subr.mxu0 0.0
    %87 = vmatpush1.msra.mxu0 0.0
    %88 = vmatprep.subr.mxu0 0.0
    %89 = vmatpush1.msra.mxu0 0.0
    %90 = vmatprep.subr.mxu0 0.0
    %91 = vmatpush1.msra.mxu0 0.0
    %92 = vmatprep.subr.mxu0 0.0
    %93 = vmatpush1.msra.mxu0 0.0
    %94 = vmatprep.subr.mxu0 0.0
    %95 = vmatpush1.msra.mxu0 0.0
    %96 = vmatprep.subr.mxu0 0.0
    %97 = vmatpush1.msra.mxu0 0.0
    %98 = vmatprep.subr.mxu0 0.0
    %99 = vmatpush1.msra.mxu0 0.0
    %100 = vmatprep.subr.mxu0 0.0
    %101 = vmatpush1.msra.mxu0 %v57
    %102 = vmatprep.subr.mxu0 0.0
    %103 = vmatpush1.msra.mxu0 %v56
    %104 = vmatprep.subr.mxu0 0.0
    %105 = vmatpush2.msra.mxu0 0.0
    %106 = vmatprep.subr.mxu0 0.0
    %107 = vmatpush2.msra.mxu0 0.0
    %108 = vmatprep.subr.mxu0 0.0
    %109 = vmatpush2.msra.mxu0 0.0
    %110 = vmatprep.subr.mxu0 0.0
    %111 = vmatpush2.msra.mxu0 0.0
    %112 = vmatprep.subr.mxu0 0.0
    %113 = vmatpush2.msra.mxu0 0.0
    %114 = vmatprep.subr.mxu0 0.0
    %115 = vmatpush2.msra.mxu0 0.0
    %116 = vmatprep.subr.mxu0 0.0
    %117 = vmatpush2.msra.mxu0 0.0
    %118 = vmatprep.subr.mxu0 0.0
    %119 = vmatpush2.msra.mxu0 0.0
    %120 = vmatprep.subr.mxu0 0.0
    %121 = vmatpush2.msra.mxu0 0.0
    %122 = vmatprep.subr.mxu0 0.0
    %123 = vmatpush2.msra.mxu0 0.0
    %124 = vmatprep.subr.mxu0 0.0
    %125 = vmatpush2.msra.mxu0 0.0
    %126 = vmatprep.subr.mxu0 0.0
    %127 = vmatpush2.msra.mxu0 0.0
    %128 = vmatprep.subr.mxu0 0.0
    %129 = vmatpush2.msra.mxu0 0.0
    %130 = vmatprep.subr.mxu0 0.0
    %131 = vmatpush2.msra.mxu0 0.0
    %132 = vmatprep.subr.mxu0 0.0
    %133 = vmatpush2.msra.mxu0 0.0
    %134 = vmatprep.subr.mxu0 0.0
    %135 = vmatpush2.msra.mxu0 0.0
    %136 = vmatprep.mubr.f32.mxu0 0.0
    %137 = vmatmul.mubr.f32.gmra.mxu0 %v67
    %v138 = vpop.f32.mrf.mxu0
    %v139 = vadd.f32 %v63, %v138
    %v140 = vpop.f32.mrf.mxu0
    %141 = vmatprep.mubr.f32.mxu0 0.0
    %142 = vmatmul.mubr.f32.gmra.mxu0 %v70
    %v143 = vpop.f32.mrf.mxu0
    %v144 = vadd.f32 %v63, %v143
    %v145 = vpop.f32.mrf.mxu0
    %146 = vdwg.mxu0
    %v147 = vmax.f32 %v139, 0.0
    %v148 = vmax.f32 %v144, 0.0
    %v149 = vld [vmem:[%s3] sm:$0xff]
    %v150 = vld [vmem:[%s3 + $0x8] sm:$0xff]
    %v151 = vld [vmem:[%s3 + $0x10] sm:$0xff]
    %v152 = vld [vmem:[%s3 + $0x18] sm:$0xff]
    %v153 = vld [vmem:[%s3 + $0x20] sm:$0xff]
    %v154 = vld [vmem:[%s3 + $0x28] sm:$0xff]
    %v155 = vld [vmem:[%s3 + $0x30] sm:$0xff]
    %v156 = vld [vmem:[%s3 + $0x38] sm:$0xff]
    %v157 = vld [vmem:[%s3 + $0x40] sm:$0xff]
    %v158 = vld [vmem:[%s3 + $0x48] sm:$0xff]
    %v159 = vld [vmem:[%s3 + $0x50] sm:$0xff]
    %v160 = vld [vmem:[%s3 + $0x58] sm:$0xff]
    %v161 = vld [vmem:[%s3 + $0x60] sm:$0xff]
    %v162 = vld [vmem:[%s3 + $0x68] sm:$0xff]
    %v163 = vld [vmem:[%s3 + $0x70] sm:$0xff]
    %v164 = vld [vmem:[%s3 + $0x78] sm:$0xff]
    %v165 = vld [vmem:[%s4] sm:$0x1]
    %v167 = vlaneseq
    %v168 = vshrl.u32 %v167, 7
    %v169 = vsub.s32 0, %v168
    %v170 = vrot.slane %v165, %v169
    %172 = vmatprep.subr.mxu0 0.0
    %173 = vmatpush1.msra.mxu0 %v164
    %174 = vmatprep.subr.mxu0 0.0
    %175 = vmatpush1.msra.mxu0 %v163
    %176 = vmatprep.subr.mxu0 0.0
    %177 = vmatpush1.msra.mxu0 %v162
    %178 = vmatprep.subr.mxu0 0.0
    %179 = vmatpush1.msra.mxu0 %v161
    %180 = vmatprep.subr.mxu0 0.0
    %181 = vmatpush1.msra.mxu0 %v160
    %182 = vmatprep.subr.mxu0 0.0
    %183 = vmatpush1.msra.mxu0 %v159
    %184 = vmatprep.subr.mxu0 0.0
    %185 = vmatpush1.msra.mxu0 %v158
    %186 = vmatprep.subr.mxu0 0.0
    %187 = vmatpush1.msra.mxu0 %v157
    %188 = vmatprep.subr.mxu0 0.0
    %189 = vmatpush1.msra.mxu0 %v156
    %190 = vmatprep.subr.mxu0 0.0
    %191 = vmatpush1.msra.mxu0 %v155
    %192 = vmatprep.subr.mxu0 0.0
    %193 = vmatpush1.msra.mxu0 %v154
    %194 = vmatprep.subr.mxu0 0.0
    %195 = vmatpush1.msra.mxu0 %v153
    %196 = vmatprep.subr.mxu0 0.0
    %197 = vmatpush1.msra.mxu0 %v152
    %198 = vmatprep.subr.mxu0 0.0
    %199 = vmatpush1.msra.mxu0 %v151
    %200 = vmatprep.subr.mxu0 0.0
    %201 = vmatpush1.msra.mxu0 %v150
    %202 = vmatprep.subr.mxu0 0.0
    %203 = vmatpush1.msra.mxu0 %v149
    %204 = vmatprep.subr.mxu0 0.0
    %205 = vmatpush2.msra.mxu0 0.0
    %206 = vmatprep.subr.mxu0 0.0
    %207 = vmatpush2.msra.mxu0 0.0
    %208 = vmatprep.subr.mxu0 0.0
    %209 = vmatpush2.msra.mxu0 0.0
    %210 = vmatprep.subr.mxu0 0.0
    %211 = vmatpush2.msra.mxu0 0.0
    %212 = vmatprep.subr.mxu0 0.0
    %213 = vmatpush2.msra.mxu0 0.0
    %214 = vmatprep.subr.mxu0 0.0
    %215 = vmatpush2.msra.mxu0 0.0
    %216 = vmatprep.subr.mxu0 0.0
    %217 = vmatpush2.msra.mxu0 0.0
    %218 = vmatprep.subr.mxu0 0.0
    %219 = vmatpush2.msra.mxu0 0.0
    %220 = vmatprep.subr.mxu0 0.0
    %221 = vmatpush2.msra.mxu0 0.0
    %222 = vmatprep.subr.mxu0 0.0
    %223 = vmatpush2.msra.mxu0 0.0
    %224 = vmatprep.subr.mxu0 0.0
    %225 = vmatpush2.msra.mxu0 0.0
    %226 = vmatprep.subr.mxu0 0.0
    %227 = vmatpush2.msra.mxu0 0.0
    %228 = vmatprep.subr.mxu0 0.0
    %229 = vmatpush2.msra.mxu0 0.0
    %230 = vmatprep.subr.mxu0 0.0
    %231 = vmatpush2.msra.mxu0 0.0
    %232 = vmatprep.subr.mxu0 0.0
    %233 = vmatpush2.msra.mxu0 0.0
    %234 = vmatprep.subr.mxu0 0.0
    %235 = vmatpush2.msra.mxu0 0.0
    %236 = vmatprep.mubr.f32.mxu0 0.0
    %237 = vmatmul.mubr.f32.gmra.mxu0 %v147
    %v238 = vpop.f32.mrf.mxu0
    %v239 = vadd.f32 %v170, %v238
    %v240 = vpop.f32.mrf.mxu0
    %241 = vmatprep.mubr.f32.mxu0 0.0
    %242 = vmatmul.mubr.f32.gmra.mxu0 %v148
    %v243 = vpop.f32.mrf.mxu0
    %v244 = vadd.f32 %v170, %v243
    %v245 = vpop.f32.mrf.mxu0
    %246 = vdwg.mxu0
    %v247 = vmax.f32 %v239, 0.0
    %v248 = vmax.f32 %v244, 0.0
    %v249 = vld [vmem:[%s5] sm:$0xff]
    %v250 = vld [vmem:[%s5 + $0x8] sm:$0xff]
    %v251 = vld [vmem:[%s5 + $0x10] sm:$0xff]
    %v252 = vld [vmem:[%s5 + $0x18] sm:$0xff]
    %v253 = vld [vmem:[%s5 + $0x20] sm:$0xff]
    %v254 = vld [vmem:[%s5 + $0x28] sm:$0xff]
    %v255 = vld [vmem:[%s5 + $0x30] sm:$0xff]
    %v256 = vld [vmem:[%s5 + $0x38] sm:$0xff]
    %v257 = vld [vmem:[%s5 + $0x40] sm:$0xff]
    %v258 = vld [vmem:[%s5 + $0x48] sm:$0xff]
    %v259 = vld [vmem:[%s5 + $0x50] sm:$0xff]
    %v260 = vld [vmem:[%s5 + $0x58] sm:$0xff]
    %v261 = vld [vmem:[%s5 + $0x60] sm:$0xff]
    %v262 = vld [vmem:[%s5 + $0x68] sm:$0xff]
    %v263 = vld [vmem:[%s5 + $0x70] sm:$0xff]
    %v264 = vld [vmem:[%s5 + $0x78] sm:$0xff]
    %v265 = vld [vmem:[%s6] sm:$0x1]
    %v267 = vlaneseq
    %v268 = vshrl.u32 %v267, 7
    %v269 = vsub.s32 0, %v268
    %v270 = vrot.slane %v265, %v269
    %272 = vmatprep.subr.mxu0 0.0
    %273 = vmatpush1.msra.mxu0 %v264
    %274 = vmatprep.subr.mxu0 0.0
    %275 = vmatpush1.msra.mxu0 %v263
    %276 = vmatprep.subr.mxu0 0.0
    %277 = vmatpush1.msra.mxu0 %v262
    %278 = vmatprep.subr.mxu0 0.0
    %279 = vmatpush1.msra.mxu0 %v261
    %280 = vmatprep.subr.mxu0 0.0
    %281 = vmatpush1.msra.mxu0 %v260
    %282 = vmatprep.subr.mxu0 0.0
    %283 = vmatpush1.msra.mxu0 %v259
    %284 = vmatprep.subr.mxu0 0.0
    %285 = vmatpush1.msra.mxu0 %v258
    %286 = vmatprep.subr.mxu0 0.0
    %287 = vmatpush1.msra.mxu0 %v257
    %288 = vmatprep.subr.mxu0 0.0
    %289 = vmatpush1.msra.mxu0 %v256
    %290 = vmatprep.subr.mxu0 0.0
    %291 = vmatpush1.msra.mxu0 %v255
    %292 = vmatprep.subr.mxu0 0.0
    %293 = vmatpush1.msra.mxu0 %v254
    %294 = vmatprep.subr.mxu0 0.0
    %295 = vmatpush1.msra.mxu0 %v253
    %296 = vmatprep.subr.mxu0 0.0
    %297 = vmatpush1.msra.mxu0 %v252
    %298 = vmatprep.subr.mxu0 0.0
    %299 = vmatpush1.msra.mxu0 %v251
    %300 = vmatprep.subr.mxu0 0.0
    %301 = vmatpush1.msra.mxu0 %v250
    %302 = vmatprep.subr.mxu0 0.0
    %303 = vmatpush1.msra.mxu0 %v249
    %304 = vmatprep.subr.mxu0 0.0
    %305 = vmatpush2.msra.mxu0 0.0
    %306 = vmatprep.subr.mxu0 0.0
    %307 = vmatpush2.msra.mxu0 0.0
    %308 = vmatprep.subr.mxu0 0.0
    %309 = vmatpush2.msra.mxu0 0.0
    %310 = vmatprep.subr.mxu0 0.0
    %311 = vmatpush2.msra.mxu0 0.0
    %312 = vmatprep.subr.mxu0 0.0
    %313 = vmatpush2.msra.mxu0 0.0
    %314 = vmatprep.subr.mxu0 0.0
    %315 = vmatpush2.msra.mxu0 0.0
    %316 = vmatprep.subr.mxu0 0.0
    %317 = vmatpush2.msra.mxu0 0.0
    %318 = vmatprep.subr.mxu0 0.0
    %319 = vmatpush2.msra.mxu0 0.0
    %320 = vmatprep.subr.mxu0 0.0
    %321 = vmatpush2.msra.mxu0 0.0
    %322 = vmatprep.subr.mxu0 0.0
    %323 = vmatpush2.msra.mxu0 0.0
    %324 = vmatprep.subr.mxu0 0.0
    %325 = vmatpush2.msra.mxu0 0.0
    %326 = vmatprep.subr.mxu0 0.0
    %327 = vmatpush2.msra.mxu0 0.0
    %328 = vmatprep.subr.mxu0 0.0
    %329 = vmatpush2.msra.mxu0 0.0
    %330 = vmatprep.subr.mxu0 0.0
    %331 = vmatpush2.msra.mxu0 0.0
    %332 = vmatprep.subr.mxu0 0.0
    %333 = vmatpush2.msra.mxu0 0.0
    %334 = vmatprep.subr.mxu0 0.0
    %335 = vmatpush2.msra.mxu0 0.0
    %336 = vmatprep.mubr.f32.mxu0 0.0
    %337 = vmatmul.mubr.f32.gmra.mxu0 %v247
    %v338 = vpop.f32.mrf.mxu0
    %v339 = vadd.f32 %v270, %v338
    %v340 = vpop.f32.mrf.mxu0
    %341 = vmatprep.mubr.f32.mxu0 0.0
    %342 = vmatmul.mubr.f32.gmra.mxu0 %v248
    %v343 = vpop.f32.mrf.mxu0
    %v344 = vadd.f32 %v270, %v343
    %v345 = vpop.f32.mrf.mxu0
    %346 = vdwg.mxu0
    %vm347 = vcmask 64512
    %348 = vst.msk [vmem:[%s7] sm:$0xff] %vm347, %v339
    %349 = vst.msk [vmem:[%s7 + $0x8] sm:$0xff] %vm347, %v344
    // Predicated region
    $region38: #{tpu_custom_call.1} parent=1 // pred_check
      _
    $region39: #{tpu_custom_call.1} parent=1 // pred_check_branch
      %351 = sbr.rel (0) target = $region41
    $region40: #{tpu_custom_call.1} parent=1 // pred_region
      _
    $region41: #{tpu_custom_call.1} parent=1 // pred_fallthru
      _
    // Predicated region
    $region42: #{tpu_custom_call.1} parent=1 // pred_check
      _
    $region43: #{tpu_custom_call.1} parent=1 // pred_check_branch
      %353 = sbr.rel (0) target = $region45
    $region44: #{tpu_custom_call.1} parent=1 // pred_region
      _
    $region45: #{tpu_custom_call.1} parent=1 // pred_fallthru
      _
    %354 = vsyncpa [#allocation3], 1
    %355 = vsyncpa [#allocation5], 1

// kernel: tpu_custom_call.1
$region0: #{tpu_custom_call.1}
  #allocation0 [shape = 'u32[]', space=smem, size = 0x4, offset = 0x4, fixed_abs, tag = 'smem constant byte address 0x4 - core index']
  #allocation1 [shape = 'u32[144,128]{1,0:T(1,128)}', space=vmem, size = 0x12000, scoped, tag = 'internal scratch']
  %s0 = inlined_call_operand.hbm [shape: f32[16,16], index: 0, kind: input, shape index: {}]
  %s1 = inlined_call_operand.hbm [shape: f32[16,128], index: 1, kind: input, shape index: {}]
  %s2 = inlined_call_operand.vmem [shape: f32[1,128], index: 2, kind: input, shape index: {}]
  %s3 = inlined_call_operand.vmem [shape: f32[128,128], index: 3, kind: input, shape index: {}]
  %s4 = inlined_call_operand.vmem [shape: f32[1,128], index: 4, kind: input, shape index: {}]
  %s5 = inlined_call_operand.vmem [shape: f32[128,8], index: 5, kind: input, shape index: {}]
  %s6 = inlined_call_operand.vmem [shape: f32[1,8], index: 6, kind: input, shape index: {}]
  %s7 = inlined_call_operand.vmem [shape: f32[16,8], index: 7, kind: output, shape index: {}]
  %s8 = sld [smem:[#allocation0]]
  $region46: #{tpu_custom_call.1} parent=0
    _
  %s10 = ssub.s32 1, %s8
  %s11 = scalar_select 0, %s10, %s8
  $region1: #{tpu_custom_call.1} parent=0
    #allocation2 [shape = 'u8[8192]{0}', space=vmem, size = 0x2000, scoped, tag = 'input window, operand 0, single buffered']
    #allocation3 [shape = 's32[1]{0}', space=sflag, size = 0x4, scoped, tag = 'scoped memory for tpu_custom_call.1']
    #allocation4 [shape = 'u8[8192]{0}', space=vmem, size = 0x2000, scoped, tag = 'input window, operand 1, single buffered']
    #allocation5 [shape = 's32[1]{0}', space=sflag, size = 0x4, scoped, tag = 'scoped memory for tpu_custom_call.1']
    %12 = vsyncpa [#allocation3], 0
    %13 = vsyncpa [#allocation5], 0
    // Predicated region
    $region2: #{tpu_custom_call.1} parent=1 // pred_check
      _
    $region3: #{tpu_custom_call.1} parent=1 // pred_check_branch
      %15 = sbr.rel (0) target = $region5
    $region4: #{tpu_custom_call.1} parent=1 // pred_region
      %s17 = ssub.s32 256, 256
      %18 = vsyncadd [#allocation3], %s17
      %s19 = sshll.u32 [#allocation2], 4
      %s20 = int_to_ptr.vmem [resolvable:$true] %s19
      %25 = dma.hbm_to_vmem [thread:$0]  %s0, 256, %s20, [#allocation3], 128, 128, 8
    $region5: #{tpu_custom_call.1} parent=1 // pred_fallthru
      _
    // Predicated region
    $region6: #{tpu_custom_call.1} parent=1 // pred_check
      _
    $region7: #{tpu_custom_call.1} parent=1 // pred_check_branch
      %27 = sbr.rel (0) target = $region9
    $region8: #{tpu_custom_call.1} parent=1 // pred_region
      %s29 = ssub.s32 256, 256
      %30 = vsyncadd [#allocation5], %s29
      %s31 = sshll.u32 [#allocation4], 4
      %s32 = int_to_ptr.vmem [resolvable:$true] %s31
      %37 = dma.hbm_to_vmem [thread:$0]  %s1, 256, %s32, [#allocation5], 128, 128, 8
    $region9: #{tpu_custom_call.1} parent=1 // pred_fallthru
      _
    // Predicated region
    $region10: #{tpu_custom_call.1} parent=1 // pred_check
      _
    $region11: #{tpu_custom_call.1} parent=1 // pred_check_branch
      %39 = sbr.rel (0) target = $region13
    $region12: #{tpu_custom_call.1} parent=1 // pred_region
      _
    $region13: #{tpu_custom_call.1} parent=1 // pred_fallthru
      _
    // Predicated region
    $region14: #{tpu_custom_call.1} parent=1 // pred_check
      _
    $region15: #{tpu_custom_call.1} parent=1 // pred_check_branch
      %41 = sbr.rel (0) target = $region17
    $region16: #{tpu_custom_call.1} parent=1 // pred_region
      _
    $region17: #{tpu_custom_call.1} parent=1 // pred_fallthru
      _
    // Predicated region
    $region18: #{tpu_custom_call.1} parent=1 // pred_check
      _
    $region19: #{tpu_custom_call.1} parent=1 // pred_check_branch
      %43 = sbr.rel (0) target = $region21
    $region20: #{tpu_custom_call.1} parent=1 // pred_region
      _
    $region21: #{tpu_custom_call.1} parent=1 // pred_fallthru
      _
    // Predicated region
    $region22: #{tpu_custom_call.1} parent=1 // pred_check
      _
    $region23: #{tpu_custom_call.1} parent=1 // pred_check_branch
      %45 = sbr.rel (0) target = $region25
    $region24: #{tpu_custom_call.1} parent=1 // pred_region
      _
    $region25: #{tpu_custom_call.1} parent=1 // pred_fallthru
      _
    // Predicated region
    $region26: #{tpu_custom_call.1} parent=1 // pred_check
      _
    $region27: #{tpu_custom_call.1} parent=1 // pred_check_branch
      %47 = sbr.rel (0) target = $region29
    $region28: #{tpu_custom_call.1} parent=1 // pred_region
      _
    $region29: #{tpu_custom_call.1} parent=1 // pred_fallthru
      _
    // Predicated region
    $region30: #{tpu_custom_call.1} parent=1 // pred_check
      _
    $region31: #{tpu_custom_call.1} parent=1 // pred_check_branch
      %49 = sbr.rel (0) target = $region33
    $region32: #{tpu_custom_call.1} parent=1 // pred_region
      %50 = dma.done [#allocation3], 256
    $region33: #{tpu_custom_call.1} parent=1 // pred_fallthru
      _
    // Predicated region
    $region34: #{tpu_custom_call.1} parent=1 // pred_check
      _
    $region35: #{tpu_custom_call.1} parent=1 // pred_check_branch
      %52 = sbr.rel (0) target = $region37
    $region36: #{tpu_custom_call.1} parent=1 // pred_region
      %53 = dma.done [#allocation5], 256
    $region37: #{tpu_custom_call.1} parent=1 // pred_fallthru
      _
    %v54 = vld [vmem:[#allocation2] sm:$0xff]
    %v55 = vld [vmem:[#allocation2 + $0x8] sm:$0xff]
    %v56 = vld [vmem:[#allocation4] sm:$0xff]
    %v57 = vld [vmem:[#allocation4 + $0x8] sm:$0xff]
    %v58 = vld [vmem:[%s2] sm:$0x1]
    %v60 = vlaneseq
    %v61 = vshrl.u32 %v60, 7
    %v62 = vsub.s32 0, %v61
    %v63 = vrot.slane %v58, %v62
    %vm65 = vcmask 130048
    %v67 = vsel %vm65, %v54, 0
    %v70 = vsel %vm65, %v55, 0
    %72 = vmatprep.subr.mxu0 0.0
    %73 = vmatpush1.msra.mxu0 0.0
    %74 = vmatprep.subr.mxu0 0.0
    %75 = vmatpush1.msra.mxu0 0.0
    %76 = vmatprep.subr.mxu0 0.0
    %77 = vmatpush1.msra.mxu0 0.0
    %78 = vmatprep.subr.mxu0 0.0
    %79 = vmatpush1.msra.mxu0 0.0
    %80 = vmatprep.subr.mxu0 0.0
    %81 = vmatpush1.msra.mxu0 0.0
    %82 = vmatprep.subr.mxu0 0.0
    %83 = vmatpush1.msra.mxu0 0.0
    %84 = vmatprep.subr.mxu0 0.0
    %85 = vmatpush1.msra.mxu0 0.0
    %86 = vmatprep.subr.mxu0 0.0
    %87 = vmatpush1.msra.mxu0 0.0
    %88 = vmatprep.subr.mxu0 0.0
    %89 = vmatpush1.msra.mxu0 0.0
    %90 = vmatprep.subr.mxu0 0.0
    %91 = vmatpush1.msra.mxu0 0.0
    %92 = vmatprep.subr.mxu0 0.0
    %93 = vmatpush1.msra.mxu0 0.0
    %94 = vmatprep.subr.mxu0 0.0
    %95 = vmatpush1.msra.mxu0 0.0
    %96 = vmatprep.subr.mxu0 0.0
    %97 = vmatpush1.msra.mxu0 0.0
    %98 = vmatprep.subr.mxu0 0.0
    %99 = vmatpush1.msra.mxu0 0.0
    %100 = vmatprep.subr.mxu0 0.0
    %101 = vmatpush1.msra.mxu0 %v57
    %102 = vmatprep.subr.mxu0 0.0
    %103 = vmatpush1.msra.mxu0 %v56
    %104 = vmatprep.subr.mxu0 0.0
    %105 = vmatpush2.msra.mxu0 0.0
    %106 = vmatprep.subr.mxu0 0.0
    %107 = vmatpush2.msra.mxu0 0.0
    %108 = vmatprep.subr.mxu0 0.0
    %109 = vmatpush2.msra.mxu0 0.0
    %110 = vmatprep.subr.mxu0 0.0
    %111 = vmatpush2.msra.mxu0 0.0
    %112 = vmatprep.subr.mxu0 0.0
    %113 = vmatpush2.msra.mxu0 0.0
    %114 = vmatprep.subr.mxu0 0.0
    %115 = vmatpush2.msra.mxu0 0.0
    %116 = vmatprep.subr.mxu0 0.0
    %117 = vmatpush2.msra.mxu0 0.0
    %118 = vmatprep.subr.mxu0 0.0
    %119 = vmatpush2.msra.mxu0 0.0
    %120 = vmatprep.subr.mxu0 0.0
    %121 = vmatpush2.msra.mxu0 0.0
    %122 = vmatprep.subr.mxu0 0.0
    %123 = vmatpush2.msra.mxu0 0.0
    %124 = vmatprep.subr.mxu0 0.0
    %125 = vmatpush2.msra.mxu0 0.0
    %126 = vmatprep.subr.mxu0 0.0
    %127 = vmatpush2.msra.mxu0 0.0
    %128 = vmatprep.subr.mxu0 0.0
    %129 = vmatpush2.msra.mxu0 0.0
    %130 = vmatprep.subr.mxu0 0.0
    %131 = vmatpush2.msra.mxu0 0.0
    %132 = vmatprep.subr.mxu0 0.0
    %133 = vmatpush2.msra.mxu0 0.0
    %134 = vmatprep.subr.mxu0 0.0
    %135 = vmatpush2.msra.mxu0 0.0
    %136 = vmatprep.mubr.f32.mxu0 0.0
    %137 = vmatmul.mubr.f32.gmra.mxu0 %v67
    %v138 = vpop.f32.mrf.mxu0
    %v139 = vadd.f32 %v63, %v138
    %v140 = vpop.f32.mrf.mxu0
    %141 = vmatprep.mubr.f32.mxu0 0.0
    %142 = vmatmul.mubr.f32.gmra.mxu0 %v70
    %v143 = vpop.f32.mrf.mxu0
    %v144 = vadd.f32 %v63, %v143
    %v145 = vpop.f32.mrf.mxu0
    %146 = vdwg.mxu0
    %v147 = vmax.f32 %v139, 0.0
    %v148 = vmax.f32 %v144, 0.0
    %v149 = vld [vmem:[%s3] sm:$0xff]
    %v150 = vld [vmem:[%s3 + $0x8] sm:$0xff]
    %v151 = vld [vmem:[%s3 + $0x10] sm:$0xff]
    %v152 = vld [vmem:[%s3 + $0x18] sm:$0xff]
    %v153 = vld [vmem:[%s3 + $0x20] sm:$0xff]
    %v154 = vld [vmem:[%s3 + $0x28] sm:$0xff]
    %v155 = vld [vmem:[%s3 + $0x30] sm:$0xff]
    %v156 = vld [vmem:[%s3 + $0x38] sm:$0xff]
    %v157 = vld [vmem:[%s3 + $0x40] sm:$0xff]
    %v158 = vld [vmem:[%s3 + $0x48] sm:$0xff]
    %v159 = vld [vmem:[%s3 + $0x50] sm:$0xff]
    %v160 = vld [vmem:[%s3 + $0x58] sm:$0xff]
    %v161 = vld [vmem:[%s3 + $0x60] sm:$0xff]
    %v162 = vld [vmem:[%s3 + $0x68] sm:$0xff]
    %v163 = vld [vmem:[%s3 + $0x70] sm:$0xff]
    %v164 = vld [vmem:[%s3 + $0x78] sm:$0xff]
    %v165 = vld [vmem:[%s4] sm:$0x1]
    %v167 = vlaneseq
    %v168 = vshrl.u32 %v167, 7
    %v169 = vsub.s32 0, %v168
    %v170 = vrot.slane %v165, %v169
    %172 = vmatprep.subr.mxu0 0.0
    %173 = vmatpush1.msra.mxu0 %v164
    %174 = vmatprep.subr.mxu0 0.0
    %175 = vmatpush1.msra.mxu0 %v163
    %176 = vmatprep.subr.mxu0 0.0
    %177 = vmatpush1.msra.mxu0 %v162
    %178 = vmatprep.subr.mxu0 0.0
    %179 = vmatpush1.msra.mxu0 %v161
    %180 = vmatprep.subr.mxu0 0.0
    %181 = vmatpush1.msra.mxu0 %v160
    %182 = vmatprep.subr.mxu0 0.0
    %183 = vmatpush1.msra.mxu0 %v159
    %184 = vmatprep.subr.mxu0 0.0
    %185 = vmatpush1.msra.mxu0 %v158
    %186 = vmatprep.subr.mxu0 0.0
    %187 = vmatpush1.msra.mxu0 %v157
    %188 = vmatprep.subr.mxu0 0.0
    %189 = vmatpush1.msra.mxu0 %v156
    %190 = vmatprep.subr.mxu0 0.0
    %191 = vmatpush1.msra.mxu0 %v155
    %192 = vmatprep.subr.mxu0 0.0
    %193 = vmatpush1.msra.mxu0 %v154
    %194 = vmatprep.subr.mxu0 0.0
    %195 = vmatpush1.msra.mxu0 %v153
    %196 = vmatprep.subr.mxu0 0.0
    %197 = vmatpush1.msra.mxu0 %v152
    %198 = vmatprep.subr.mxu0 0.0
    %199 = vmatpush1.msra.mxu0 %v151
    %200 = vmatprep.subr.mxu0 0.0
    %201 = vmatpush1.msra.mxu0 %v150
    %202 = vmatprep.subr.mxu0 0.0
    %203 = vmatpush1.msra.mxu0 %v149
    %204 = vmatprep.subr.mxu0 0.0
    %205 = vmatpush2.msra.mxu0 0.0
    %206 = vmatprep.subr.mxu0 0.0
    %207 = vmatpush2.msra.mxu0 0.0
    %208 = vmatprep.subr.mxu0 0.0
    %209 = vmatpush2.msra.mxu0 0.0
    %210 = vmatprep.subr.mxu0 0.0
    %211 = vmatpush2.msra.mxu0 0.0
    %212 = vmatprep.subr.mxu0 0.0
    %213 = vmatpush2.msra.mxu0 0.0
    %214 = vmatprep.subr.mxu0 0.0
    %215 = vmatpush2.msra.mxu0 0.0
    %216 = vmatprep.subr.mxu0 0.0
    %217 = vmatpush2.msra.mxu0 0.0
    %218 = vmatprep.subr.mxu0 0.0
    %219 = vmatpush2.msra.mxu0 0.0
    %220 = vmatprep.subr.mxu0 0.0
    %221 = vmatpush2.msra.mxu0 0.0
    %222 = vmatprep.subr.mxu0 0.0
    %223 = vmatpush2.msra.mxu0 0.0
    %224 = vmatprep.subr.mxu0 0.0
    %225 = vmatpush2.msra.mxu0 0.0
    %226 = vmatprep.subr.mxu0 0.0
    %227 = vmatpush2.msra.mxu0 0.0
    %228 = vmatprep.subr.mxu0 0.0
    %229 = vmatpush2.msra.mxu0 0.0
    %230 = vmatprep.subr.mxu0 0.0
    %231 = vmatpush2.msra.mxu0 0.0
    %232 = vmatprep.subr.mxu0 0.0
    %233 = vmatpush2.msra.mxu0 0.0
    %234 = vmatprep.subr.mxu0 0.0
    %235 = vmatpush2.msra.mxu0 0.0
    %236 = vmatprep.mubr.f32.mxu0 0.0
    %237 = vmatmul.mubr.f32.gmra.mxu0 %v147
    %v238 = vpop.f32.mrf.mxu0
    %v239 = vadd.f32 %v170, %v238
    %v240 = vpop.f32.mrf.mxu0
    %241 = vmatprep.mubr.f32.mxu0 0.0
    %242 = vmatmul.mubr.f32.gmra.mxu0 %v148
    %v243 = vpop.f32.mrf.mxu0
    %v244 = vadd.f32 %v170, %v243
    %v245 = vpop.f32.mrf.mxu0
    %246 = vdwg.mxu0
    %v247 = vmax.f32 %v239, 0.0
    %v248 = vmax.f32 %v244, 0.0
    %v249 = vld [vmem:[%s5] sm:$0xff]
    %v250 = vld [vmem:[%s5 + $0x8] sm:$0xff]
    %v251 = vld [vmem:[%s5 + $0x10] sm:$0xff]
    %v252 = vld [vmem:[%s5 + $0x18] sm:$0xff]
    %v253 = vld [vmem:[%s5 + $0x20] sm:$0xff]
    %v254 = vld [vmem:[%s5 + $0x28] sm:$0xff]
    %v255 = vld [vmem:[%s5 + $0x30] sm:$0xff]
    %v256 = vld [vmem:[%s5 + $0x38] sm:$0xff]
    %v257 = vld [vmem:[%s5 + $0x40] sm:$0xff]
    %v258 = vld [vmem:[%s5 + $0x48] sm:$0xff]
    %v259 = vld [vmem:[%s5 + $0x50] sm:$0xff]
    %v260 = vld [vmem:[%s5 + $0x58] sm:$0xff]
    %v261 = vld [vmem:[%s5 + $0x60] sm:$0xff]
    %v262 = vld [vmem:[%s5 + $0x68] sm:$0xff]
    %v263 = vld [vmem:[%s5 + $0x70] sm:$0xff]
    %v264 = vld [vmem:[%s5 + $0x78] sm:$0xff]
    %v265 = vld [vmem:[%s6] sm:$0x1]
    %v267 = vlaneseq
    %v268 = vshrl.u32 %v267, 7
    %v269 = vsub.s32 0, %v268
    %v270 = vrot.slane %v265, %v269
    %272 = vmatprep.subr.mxu0 0.0
    %273 = vmatpush1.msra.mxu0 %v264
    %274 = vmatprep.subr.mxu0 0.0
    %275 = vmatpush1.msra.mxu0 %v263
    %276 = vmatprep.subr.mxu0 0.0
    %277 = vmatpush1.msra.mxu0 %v262
    %278 = vmatprep.subr.mxu0 0.0
    %279 = vmatpush1.msra.mxu0 %v261
    %280 = vmatprep.subr.mxu0 0.0
    %281 = vmatpush1.msra.mxu0 %v260
    %282 = vmatprep.subr.mxu0 0.0
    %283 = vmatpush1.msra.mxu0 %v259
    %284 = vmatprep.subr.mxu0 0.0
    %285 = vmatpush1.msra.mxu0 %v258
    %286 = vmatprep.subr.mxu0 0.0
    %287 = vmatpush1.msra.mxu0 %v257
    %288 = vmatprep.subr.mxu0 0.0
    %289 = vmatpush1.msra.mxu0 %v256
    %290 = vmatprep.subr.mxu0 0.0
    %291 = vmatpush1.msra.mxu0 %v255
    %292 = vmatprep.subr.mxu0 0.0
    %293 = vmatpush1.msra.mxu0 %v254
    %294 = vmatprep.subr.mxu0 0.0
    %295 = vmatpush1.msra.mxu0 %v253
    %296 = vmatprep.subr.mxu0 0.0
    %297 = vmatpush1.msra.mxu0 %v252
    %298 = vmatprep.subr.mxu0 0.0
    %299 = vmatpush1.msra.mxu0 %v251
    %300 = vmatprep.subr.mxu0 0.0
    %301 = vmatpush1.msra.mxu0 %v250
    %302 = vmatprep.subr.mxu0 0.0
    %303 = vmatpush1.msra.mxu0 %v249
    %304 = vmatprep.subr.mxu0 0.0
    %305 = vmatpush2.msra.mxu0 0.0
    %306 = vmatprep.subr.mxu0 0.0
    %307 = vmatpush2.msra.mxu0 0.0
    %308 = vmatprep.subr.mxu0 0.0
    %309 = vmatpush2.msra.mxu0 0.0
    %310 = vmatprep.subr.mxu0 0.0
    %311 = vmatpush2.msra.mxu0 0.0
    %312 = vmatprep.subr.mxu0 0.0
    %313 = vmatpush2.msra.mxu0 0.0
    %314 = vmatprep.subr.mxu0 0.0
    %315 = vmatpush2.msra.mxu0 0.0
    %316 = vmatprep.subr.mxu0 0.0
    %317 = vmatpush2.msra.mxu0 0.0
    %318 = vmatprep.subr.mxu0 0.0
    %319 = vmatpush2.msra.mxu0 0.0
    %320 = vmatprep.subr.mxu0 0.0
    %321 = vmatpush2.msra.mxu0 0.0
    %322 = vmatprep.subr.mxu0 0.0
    %323 = vmatpush2.msra.mxu0 0.0
    %324 = vmatprep.subr.mxu0 0.0
    %325 = vmatpush2.msra.mxu0 0.0
    %326 = vmatprep.subr.mxu0 0.0
    %327 = vmatpush2.msra.mxu0 0.0
    %328 = vmatprep.subr.mxu0 0.0
    %329 = vmatpush2.msra.mxu0 0.0
    %330 = vmatprep.subr.mxu0 0.0
    %331 = vmatpush2.msra.mxu0 0.0
    %332 = vmatprep.subr.mxu0 0.0
    %333 = vmatpush2.msra.mxu0 0.0
    %334 = vmatprep.subr.mxu0 0.0
    %335 = vmatpush2.msra.mxu0 0.0
    %336 = vmatprep.mubr.f32.mxu0 0.0
    %337 = vmatmul.mubr.f32.gmra.mxu0 %v247
    %v338 = vpop.f32.mrf.mxu0
    %v339 = vadd.f32 %v270, %v338
    %v340 = vpop.f32.mrf.mxu0
    %341 = vmatprep.mubr.f32.mxu0 0.0
    %342 = vmatmul.mubr.f32.gmra.mxu0 %v248
    %v343 = vpop.f32.mrf.mxu0
    %v344 = vadd.f32 %v270, %v343
    %v345 = vpop.f32.mrf.mxu0
    %346 = vdwg.mxu0
    %vm347 = vcmask 64512
    %348 = vst.msk [vmem:[%s7] sm:$0xff] %vm347, %v339
    %349 = vst.msk [vmem:[%s7 + $0x8] sm:$0xff] %vm347, %v344
    // Predicated region
    $region38: #{tpu_custom_call.1} parent=1 // pred_check
      _
    $region39: #{tpu_custom_call.1} parent=1 // pred_check_branch
      %351 = sbr.rel (0) target = $region41
    $region40: #{tpu_custom_call.1} parent=1 // pred_region
      _
    $region41: #{tpu_custom_call.1} parent=1 // pred_fallthru
      _
    // Predicated region
    $region42: #{tpu_custom_call.1} parent=1 // pred_check
      _
    $region43: #{tpu_custom_call.1} parent=1 // pred_check_branch
      %353 = sbr.rel (0) target = $region45
    $region44: #{tpu_custom_call.1} parent=1 // pred_region
      _
    $region45: #{tpu_custom_call.1} parent=1 // pred_fallthru
      _
    %354 = vsyncpa [#allocation3], 1
    %355 = vsyncpa [#allocation5], 1

</llo_original>
